<compile_context>
chip_gen: v5e
topology: v5e:2x2
jax: 0.10.0
libtpu: 0.0.40
codegen_flags: <defaults>
</compile_context>

<pallas_src>
import functools

import jax
import jax.numpy as jnp
from jax import lax
from jax.experimental import pallas as pl
from jax.experimental.pallas import tpu as pltpu

LEAKY_SLOPE = 0.01   # nn.LeakyReLU default negative_slope
LN_EPS = 1e-5        # nn.LayerNorm default eps


def _round_up(n, m):
    return ((n + m - 1) // m) * m


def resnet_block_kernel(x_ref, w1_ref, w2_ref, p_ref, o_ref, *,
                        valid_h, mxu_dtype):
    """One (tb, Hp) batch tile.  p_ref rows: 0=b1, 1=b2, 2=gamma, 3=beta."""
    x_mxu = x_ref[...].astype(mxu_dtype)

    # Linear 1 (MXU, low-precision in / f32 acc) + LeakyReLU (VPU, f32).
    h = jnp.dot(x_mxu, w1_ref[...], preferred_element_type=jnp.float32)
    h = h + p_ref[0:1, :]
    h = jnp.where(h >= 0, h, LEAKY_SLOPE * h)

    # Linear 2 (MXU, low-precision in / f32 acc).
    h = jnp.dot(h.astype(mxu_dtype), w2_ref[...],
                preferred_element_type=jnp.float32)
    h = h + p_ref[1:2, :]

    # LayerNorm over the valid lanes, single reduction pass.  Padded lanes of
    # h are *exactly zero* (padded w2 columns / b1 / b2 entries are zero), so
    # sum(h) and sum(h*h) over all Hp lanes equal the sums over the valid H
    # lanes -- no lane mask needed.  Padded output lanes are zeroed by the
    # gamma/beta pads.
    inv_h = 1.0 / valid_h
    s1 = jnp.sum(h, axis=-1, keepdims=True)
    s2 = jnp.sum(h * h, axis=-1, keepdims=True)
    mean = s1 * inv_h
    var = jnp.maximum(s2 * inv_h - mean * mean, 0.0)   # guard f32 cancellation
    h_norm = (h - mean) * lax.rsqrt(var + LN_EPS)      # EUP rsqrt
    h_norm = h_norm * p_ref[2:3, :] + p_ref[3:4, :]

    # Residual: load x just before the store (short f32 live range).
    o_ref[...] = (h_norm + x_ref[...].astype(jnp.float32)).astype(o_ref.dtype)


def prepare_params(w1_t, b1, w2_t, b2, gamma, beta, *,
                   mxu_dtype=jnp.bfloat16):
    """One-time parameter prep, hoisted out of the per-call path.

    Weights are expected pre-transposed: w*_t has shape (H_in, H_out) so the
    kernel computes y = x @ w_t + b (== nn.Linear's x @ W.T + b).

    Zero-pad invariant (required by the kernel's unmasked LayerNorm sums):
    padded rows/cols of the weights and padded entries of b1/b2/gamma/beta
    MUST be zero -- jnp.pad guarantees that here.
    """
    H = w1_t.shape[0]
    Hp = _round_up(H, 128)             # lane-dense hidden dim
    pad = Hp - H
    # TODO(synk): on v7x, optionally store the weights in fp8 (e4m3) for the
    # MXU's native fp8 path if the accuracy budget tolerates it.
    w1p = jnp.pad(w1_t.astype(mxu_dtype), ((0, pad), (0, pad)))
    w2p = jnp.pad(w2_t.astype(mxu_dtype), ((0, pad), (0, pad)))
    params = jnp.stack([
        jnp.pad(b1.astype(jnp.float32), (0, pad)),
        jnp.pad(b2.astype(jnp.float32), (0, pad)),
        jnp.pad(gamma.astype(jnp.float32), (0, pad)),
        jnp.pad(beta.astype(jnp.float32), (0, pad)),
    ])                                  # (4, Hp) f32
    return w1p, w2p, params


def _pick_batch_tile(B, Hp, block_b):
    """Static (Python-int) batch-tile choice."""
    if block_b is None:
        # Small hidden -> bigger batch tiles to amortize the ~0.35us/step
        # pipeline overhead and keep the MXU fed.
        block_b = 1024 if Hp <= 512 else (512 if Hp <= 1024 else 256)
    if B >= 256:
        # v7x has 2 TensorCores: keep the "parallel" batch grid >= 2 steps.
        block_b = min(block_b, _round_up(-(-B // 2), 8))
    tb = min(block_b, _round_up(B, 8))
    if tb >= B:
        return B       # single block == full batch dim (always a legal block)
    return tb          # multiple of 8; Pallas masks the boundary block


def _const_spec(shape):
    """BlockSpec whose block index is constant across the grid: single-buffer
    it (double-buffering a constant-index block only wastes VMEM)."""
    idx = lambda i: (0, 0)
    buffered = getattr(pl, "Buffered", None)
    if buffered is not None:
        try:
            return pl.BlockSpec(shape, idx, pipeline_mode=buffered(1))
        except TypeError:      # older jax without pipeline_mode kwarg
            pass
    return pl.BlockSpec(shape, idx)


@functools.partial(jax.jit, static_argnames=("block_b", "mxu_dtype"))
def resnet_block(x, w1p, w2p, params, block_b=None, mxu_dtype=jnp.bfloat16):
    B, H = x.shape
    Hp = w1p.shape[0]
    pad_h = Hp - H

    tb = _pick_batch_tile(B, Hp, block_b)
    grid = (pl.cdiv(B, tb),)

    # Only the activation gets padded per call (lane-dense hidden dim); the
    # batch axis is NOT padded -- Pallas masks the boundary block.
    xp = jnp.pad(x, ((0, 0), (0, pad_h))) if pad_h else x

    row_spec = pl.BlockSpec((tb, Hp), lambda i: (i, 0))
    w_spec = _const_spec((Hp, Hp))
    p_spec = _const_spec((4, Hp))

    kernel = functools.partial(resnet_block_kernel,
                               valid_h=H, mxu_dtype=mxu_dtype)

    # Explicit VMEM budget.  Conservatively assume double-buffered weights so
    # the fallback path (no Buffered(1)) still fits under the limit.
    w_item = jnp.dtype(mxu_dtype).itemsize
    x_item = x.dtype.itemsize
    vmem_bytes = (4 * Hp * Hp * w_item            # two weights x 2 buffers
                  + 2 * 4 * Hp * 4                # packed params
                  + 2 * 2 * tb * Hp * x_item      # x + out tiles, 2 buffers
                  + 4 * tb * Hp * 4               # f32 temporaries headroom
                  + (2 << 20))                    # misc margin
    vmem_limit = int(min(max(vmem_bytes, 4 << 20), 112 << 20))

    cost = pl.CostEstimate(
        flops=4 * B * Hp * Hp,                    # two matmuls
        transcendentals=B,                        # one rsqrt per row
        bytes_accessed=(2 * Hp * Hp * w_item + 4 * Hp * 4
                        + 2 * B * Hp * x_item),
    )

    # TODO(synk): for very large Hp on v7x (64 MiB VMEM/TC) -- roughly
    # Hp >= ~2800 at tb=256 -- move the resident (Hp, Hp) weights onto a K/N
    # reduction grid axis with an f32 VMEM accumulator (P3 pattern) instead of
    # keeping them fully resident.
    out = pl.pallas_call(
        kernel,
        out_shape=jax.ShapeDtypeStruct((B, Hp), x.dtype),
        grid_spec=pltpu.PrefetchScalarGridSpec(
            num_scalar_prefetch=0,
            grid=grid,
            in_specs=[row_spec, w_spec, w_spec, p_spec],
            out_specs=row_spec,
        ),
        compiler_params=pltpu.CompilerParams(
            dimension_semantics=("parallel",),
            vmem_limit_bytes=vmem_limit),
        cost_estimate=cost,
    )(xp, w1p, w2p, params)

    return out[:, :H] if pad_h else out


def _reference(x, w1_t, b1, w2_t, b2, gamma, beta):
    h = x @ w1_t + b1
    h = jnp.where(h >= 0, h, LEAKY_SLOPE * h)
    h = h @ w2_t + b2
    mean = jnp.mean(h, axis=-1, keepdims=True)
    var = jnp.mean((h - mean) ** 2, axis=-1, keepdims=True)
    hn = (h - mean) / jnp.sqrt(var + LN_EPS)
    return hn * gamma + beta + x


if __name__ == "__main__":
    hidden = 32
    batch = 16

    key = jax.random.PRNGKey(0)
    kx, k1, k2, k3, k4 = jax.random.split(key, 5)

    x = jax.random.normal(kx, (batch, hidden), dtype=jnp.float32)

    # nn.Linear(hidden, hidden): weight (out, in), bias (out,).  Kernel takes
    # the transposed weight (in, out).
    bound = 1.0 / jnp.sqrt(hidden)
    w1 = jax.random.uniform(k1, (hidden, hidden), jnp.float32, -bound, bound)
    b1 = jax.random.uniform(k2, (hidden,), jnp.float32, -bound, bound)
    w2 = jax.random.uniform(k3, (hidden, hidden), jnp.float32, -bound, bound)
    b2 = jax.random.uniform(k4, (hidden,), jnp.float32, -bound, bound)
    w1_t, w2_t = w1.T, w2.T

    # nn.LayerNorm(hidden): weight=1, bias=0 at init.
    gamma = jnp.ones((hidden,), jnp.float32)
    beta = jnp.zeros((hidden,), jnp.float32)

    # One-time parameter prep (padding + bf16 cast hoisted out of the call).
    w1p, w2p, params = prepare_params(w1_t, b1, w2_t, b2, gamma, beta)

    out = resnet_block(x, w1p, w2p, params)
    jax.block_until_ready(out)

    ref = _reference(x, w1_t, b1, w2_t, b2, gamma, beta)
    assert out.shape == (batch, hidden)
    # bf16 MXU operands with f32 accumulation -> ~1e-2-class tolerance.
    assert jnp.allclose(out, ref, atol=3e-2, rtol=3e-2), "mismatch vs reference"

    print("KERNEL_OK")
</pallas_src>

<mosaic_0001>
module attributes {stable_mosaic.version = 11 : i64} {
  func.func @resnet_block_kernel(%arg0: i32, %arg1: memref<16x128xf32, #tpu.memory_space<vmem>>, %arg2: memref<128x128xbf16, #tpu.memory_space<vmem>>, %arg3: memref<128x128xbf16, #tpu.memory_space<vmem>>, %arg4: memref<4x128xf32, #tpu.memory_space<vmem>>, %arg5: memref<16x128xf32, #tpu.memory_space<vmem>>) attributes {dimension_semantics = [#tpu.dimension_semantics<parallel>], iteration_bounds = array<i64: 1>, scalar_prefetch = 0 : i64, scratch_operands = 0 : i64, tpu.core_type = #tpu.core_type<tc>, window_params = [{transform_indices = @transform_0, window_bounds = array<i64: 16, 128>}, {pipeline_mode = #tpu.pipeline_mode<synchronous>, transform_indices = @transform_1, window_bounds = array<i64: 128, 128>}, {pipeline_mode = #tpu.pipeline_mode<synchronous>, transform_indices = @transform_2, window_bounds = array<i64: 128, 128>}, {pipeline_mode = #tpu.pipeline_mode<synchronous>, transform_indices = @transform_3, window_bounds = array<i64: 4, 128>}, {transform_indices = @transform_4, window_bounds = array<i64: 16, 128>}]} {
    %c0 = arith.constant 0 : index
    %c0_0 = arith.constant 0 : index
    %0 = vector.load %arg1[%c0, %c0_0] : memref<16x128xf32, #tpu.memory_space<vmem>>, vector<16x128xf32>
    %1 = arith.truncf %0 : vector<16x128xf32> to vector<16x128xbf16>
    %c0_1 = arith.constant 0 : index
    %c0_2 = arith.constant 0 : index
    %2 = vector.load %arg2[%c0_1, %c0_2] : memref<128x128xbf16, #tpu.memory_space<vmem>>, vector<128x128xbf16>
    %cst = arith.constant dense<0.000000e+00> : vector<16x128xf32>
    %3 = tpu.matmul %1, %2, %cst {dimension_numbers = #tpu.dot_dimension_numbers<[1], [0], [0], [1], [0, 0, 1, 1], [], []>} : vector<16x128xbf16>, vector<128x128xbf16>, vector<16x128xf32> -> vector<16x128xf32>
    %c0_3 = arith.constant 0 : index
    %c0_4 = arith.constant 0 : index
    %4 = vector.load %arg4[%c0_3, %c0_4] : memref<4x128xf32, #tpu.memory_space<vmem>>, vector<1x128xf32>
    %5 = vector.broadcast %4 : vector<1x128xf32> to vector<16x128xf32>
    %6 = arith.addf %3, %5 : vector<16x128xf32>
    %cst_5 = arith.constant 0.000000e+00 : f32
    %7 = vector.broadcast %cst_5 : f32 to vector<16x128xf32>
    %8 = arith.cmpf oge, %6, %7 : vector<16x128xf32>
    %cst_6 = arith.constant 0.00999999977 : f32
    %9 = vector.broadcast %cst_6 : f32 to vector<16x128xf32>
    %10 = arith.mulf %9, %6 : vector<16x128xf32>
    %11 = arith.select %8, %6, %10 : vector<16x128xi1>, vector<16x128xf32>
    %12 = arith.truncf %11 : vector<16x128xf32> to vector<16x128xbf16>
    %c0_7 = arith.constant 0 : index
    %c0_8 = arith.constant 0 : index
    %13 = vector.load %arg3[%c0_7, %c0_8] : memref<128x128xbf16, #tpu.memory_space<vmem>>, vector<128x128xbf16>
    %cst_9 = arith.constant dense<0.000000e+00> : vector<16x128xf32>
    %14 = tpu.matmul %12, %13, %cst_9 {dimension_numbers = #tpu.dot_dimension_numbers<[1], [0], [0], [1], [0, 0, 1, 1], [], []>} : vector<16x128xbf16>, vector<128x128xbf16>, vector<16x128xf32> -> vector<16x128xf32>
    %c1 = arith.constant 1 : index
    %c0_10 = arith.constant 0 : index
    %15 = vector.load %arg4[%c1, %c0_10] : memref<4x128xf32, #tpu.memory_space<vmem>>, vector<1x128xf32>
    %16 = vector.broadcast %15 : vector<1x128xf32> to vector<16x128xf32>
    %17 = arith.addf %14, %16 : vector<16x128xf32>
    %cst_11 = arith.constant dense<0.000000e+00> : vector<16xf32>
    %18 = vector.multi_reduction <add>, %17, %cst_11 [1] : vector<16x128xf32> to vector<16xf32>
    %19 = vector.shape_cast %18 : vector<16xf32> to vector<16x1xf32>
    %20 = arith.mulf %17, %17 : vector<16x128xf32>
    %cst_12 = arith.constant dense<0.000000e+00> : vector<16xf32>
    %21 = vector.multi_reduction <add>, %20, %cst_12 [1] : vector<16x128xf32> to vector<16xf32>
    %22 = vector.shape_cast %21 : vector<16xf32> to vector<16x1xf32>
    %cst_13 = arith.constant 3.125000e-02 : f32
    %23 = vector.broadcast %cst_13 : f32 to vector<16x1xf32>
    %24 = arith.mulf %19, %23 : vector<16x1xf32>
    %cst_14 = arith.constant 3.125000e-02 : f32
    %25 = vector.broadcast %cst_14 : f32 to vector<16x1xf32>
    %26 = arith.mulf %22, %25 : vector<16x1xf32>
    %27 = arith.mulf %24, %24 : vector<16x1xf32>
    %28 = arith.subf %26, %27 : vector<16x1xf32>
    %cst_15 = arith.constant 0.000000e+00 : f32
    %29 = vector.broadcast %cst_15 : f32 to vector<16x1xf32>
    %30 = arith.maximumf %28, %29 : vector<16x1xf32>
    %31 = vector.broadcast %24 : vector<16x1xf32> to vector<16x128xf32>
    %32 = arith.subf %17, %31 : vector<16x128xf32>
    %cst_16 = arith.constant 9.99999974E-6 : f32
    %33 = vector.broadcast %cst_16 : f32 to vector<16x1xf32>
    %34 = arith.addf %30, %33 : vector<16x1xf32>
    %35 = math.rsqrt %34 : vector<16x1xf32>
    %36 = vector.broadcast %35 : vector<16x1xf32> to vector<16x128xf32>
    %37 = arith.mulf %32, %36 : vector<16x128xf32>
    %c2 = arith.constant 2 : index
    %c0_17 = arith.constant 0 : index
    %38 = vector.load %arg4[%c2, %c0_17] : memref<4x128xf32, #tpu.memory_space<vmem>>, vector<1x128xf32>
    %39 = vector.broadcast %38 : vector<1x128xf32> to vector<16x128xf32>
    %40 = arith.mulf %37, %39 : vector<16x128xf32>
    %c3 = arith.constant 3 : index
    %c0_18 = arith.constant 0 : index
    %41 = vector.load %arg4[%c3, %c0_18] : memref<4x128xf32, #tpu.memory_space<vmem>>, vector<1x128xf32>
    %42 = vector.broadcast %41 : vector<1x128xf32> to vector<16x128xf32>
    %43 = arith.addf %40, %42 : vector<16x128xf32>
    %c0_19 = arith.constant 0 : index
    %c0_20 = arith.constant 0 : index
    %44 = vector.load %arg1[%c0_19, %c0_20] : memref<16x128xf32, #tpu.memory_space<vmem>>, vector<16x128xf32>
    %45 = arith.addf %43, %44 : vector<16x128xf32>
    %c0_21 = arith.constant 0 : index
    %c0_22 = arith.constant 0 : index
    %46 = vector.load %arg5[%c0_21, %c0_22] : memref<16x128xf32, #tpu.memory_space<vmem>>, vector<16x128xf32>
    tpu.vector_store %arg5[%c0_21, %c0_22], %45 {strides = array<i32>} : memref<16x128xf32, #tpu.memory_space<vmem>>, vector<16x128xf32>,
    return
  }
  func.func @transform_0(%arg0: i32) -> (i32, i32) {
    %c0_i32 = arith.constant 0 : i32
    %c0_i32_0 = arith.constant 0 : i32
    return %arg0, %c0_i32 : i32, i32
  }
  func.func @transform_1(%arg0: i32) -> (i32, i32) {
    %c0_i32 = arith.constant 0 : i32
    %c0_i32_0 = arith.constant 0 : i32
    %c0_i32_1 = arith.constant 0 : i32
    return %c0_i32, %c0_i32_0 : i32, i32
  }
  func.func @transform_2(%arg0: i32) -> (i32, i32) {
    %c0_i32 = arith.constant 0 : i32
    %c0_i32_0 = arith.constant 0 : i32
    %c0_i32_1 = arith.constant 0 : i32
    return %c0_i32, %c0_i32_0 : i32, i32
  }
  func.func @transform_3(%arg0: i32) -> (i32, i32) {
    %c0_i32 = arith.constant 0 : i32
    %c0_i32_0 = arith.constant 0 : i32
    %c0_i32_1 = arith.constant 0 : i32
    return %c0_i32, %c0_i32_0 : i32, i32
  }
  func.func @transform_4(%arg0: i32) -> (i32, i32) {
    %c0_i32 = arith.constant 0 : i32
    %c0_i32_0 = arith.constant 0 : i32
    return %arg0, %c0_i32 : i32, i32
  }
}

</mosaic_0001>

<llo_original>
// kernel: resnet_block.1
$region0: #{resnet_block.1}
  #allocation0 [shape = 'u32[]', space=smem, size = 0x4, offset = 0x4, fixed_abs, tag = 'smem constant byte address 0x4 - core index']
  #allocation1 [shape = 'u32[72,128]{1,0:T(1,128)}', space=vmem, size = 0x9000, scoped, tag = 'internal scratch']
  %s0 = inlined_call_operand.vmem [shape: f32[16,128], index: 0, kind: input, shape index: {}]
  %s1 = inlined_call_operand.hbm [shape: bf16[128,128], index: 1, kind: input, shape index: {}]
  %s2 = inlined_call_operand.hbm [shape: bf16[128,128], index: 2, kind: input, shape index: {}]
  %s3 = inlined_call_operand.vmem [shape: f32[4,128], index: 3, kind: input, shape index: {}]
  %s4 = inlined_call_operand.hbm [shape: f32[16,128], index: 4, kind: output, shape index: {}]
  %s5 = sld [smem:[#allocation0]]
  $region34: #{resnet_block.1} parent=0
    _
  %s7 = ssub.s32 1, %s5
  %s8 = scalar_select 0, %s7, %s5
  $region1: #{resnet_block.1} parent=0
    #allocation2 [shape = 'u8[32768]{0}', space=vmem, size = 0x8000, scoped, tag = 'input window, operand 1, single buffered']
    #allocation3 [shape = 's32[1]{0}', space=sflag, size = 0x4, scoped, tag = 'scoped memory for resnet_block.1']
    #allocation4 [shape = 's32[1]{0}', space=sflag, size = 0x4, scoped, tag = 'scoped memory for resnet_block.1']
    #allocation5 [shape = 'u8[32768]{0}', space=vmem, size = 0x8000, scoped, tag = 'input window, operand 2, single buffered']
    #allocation6 [shape = 's32[1]{0}', space=sflag, size = 0x4, scoped, tag = 'scoped memory for resnet_block.1']
    #allocation7 [shape = 'u8[8192]{0}', space=vmem, size = 0x2000, scoped, tag = 'output window, operand 0, single buffered']
    %9 = vsyncpa [#allocation3], 0
    %10 = vsyncpa [#allocation6], 0
    %11 = vsyncpa [#allocation4], 0
    // Predicated region
    $region2: #{resnet_block.1} parent=1 // pred_check
      _
    $region3: #{resnet_block.1} parent=1 // pred_check_branch
      %13 = sbr.rel (0) target = $region5
    $region4: #{resnet_block.1} parent=1 // pred_region
      _
    $region5: #{resnet_block.1} parent=1 // pred_fallthru
      _
    // Predicated region
    $region6: #{resnet_block.1} parent=1 // pred_check
      _
    $region7: #{resnet_block.1} parent=1 // pred_check_branch
      %15 = sbr.rel (0) target = $region9
    $region8: #{resnet_block.1} parent=1 // pred_region
      %17 = vsyncadd [#allocation3], 0
      %s18 = sshll.u32 %s1, 4
      %s19 = int_to_ptr.hbm [resolvable:$true] %s18
      %s20 = sshll.u32 [#allocation2], 4
      %s21 = int_to_ptr.vmem [resolvable:$true] %s20
      %26 = dma.hbm_to_vmem [thread:$0]  %s19, 1024, %s21, [#allocation3], 64, 64, 4
    $region9: #{resnet_block.1} parent=1 // pred_fallthru
      _
    // Predicated region
    $region10: #{resnet_block.1} parent=1 // pred_check
      _
    $region11: #{resnet_block.1} parent=1 // pred_check_branch
      %28 = sbr.rel (0) target = $region13
    $region12: #{resnet_block.1} parent=1 // pred_region
      %30 = vsyncadd [#allocation6], 0
      %s31 = sshll.u32 %s2, 4
      %s32 = int_to_ptr.hbm [resolvable:$true] %s31
      %s33 = sshll.u32 [#allocation5], 4
      %s34 = int_to_ptr.vmem [resolvable:$true] %s33
      %39 = dma.hbm_to_vmem [thread:$0]  %s32, 1024, %s34, [#allocation6], 64, 64, 4
    $region13: #{resnet_block.1} parent=1 // pred_fallthru
      _
    // Predicated region
    $region14: #{resnet_block.1} parent=1 // pred_check
      _
    $region15: #{resnet_block.1} parent=1 // pred_check_branch
      %41 = sbr.rel (0) target = $region17
    $region16: #{resnet_block.1} parent=1 // pred_region
      _
    $region17: #{resnet_block.1} parent=1 // pred_fallthru
      _
    // Predicated region
    $region18: #{resnet_block.1} parent=1 // pred_check
      _
    $region19: #{resnet_block.1} parent=1 // pred_check_branch
      %43 = sbr.rel (0) target = $region21
    $region20: #{resnet_block.1} parent=1 // pred_region
      %45 = dma.done [#allocation3], 1024
    $region21: #{resnet_block.1} parent=1 // pred_fallthru
      _
    // Predicated region
    $region22: #{resnet_block.1} parent=1 // pred_check
      _
    $region23: #{resnet_block.1} parent=1 // pred_check_branch
      %47 = sbr.rel (0) target = $region25
    $region24: #{resnet_block.1} parent=1 // pred_region
      %49 = dma.done [#allocation6], 1024
    $region25: #{resnet_block.1} parent=1 // pred_fallthru
      _
    %v50 = vld [vmem:[%s0] sm:$0xff]
    %v51 = vld [vmem:[%s0 + $0x8] sm:$0xff]
    %v52 = vpack.c.bf16 %v51, %v50
    %v53 = vld [vmem:[#allocation2] sm:$0xf]
    %v54 = vld [vmem:[#allocation2 + $0x4] sm:$0xf]
    %v55 = vld [vmem:[#allocation2 + $0x8] sm:$0xf]
    %v56 = vld [vmem:[#allocation2 + $0xc] sm:$0xf]
    %v57 = vld [vmem:[#allocation2 + $0x10] sm:$0xf]
    %v58 = vld [vmem:[#allocation2 + $0x14] sm:$0xf]
    %v59 = vld [vmem:[#allocation2 + $0x18] sm:$0xf]
    %v60 = vld [vmem:[#allocation2 + $0x1c] sm:$0xf]
    %v61 = vld [vmem:[#allocation2 + $0x20] sm:$0xf]
    %v62 = vld [vmem:[#allocation2 + $0x24] sm:$0xf]
    %v63 = vld [vmem:[#allocation2 + $0x28] sm:$0xf]
    %v64 = vld [vmem:[#allocation2 + $0x2c] sm:$0xf]
    %v65 = vld [vmem:[#allocation2 + $0x30] sm:$0xf]
    %v66 = vld [vmem:[#allocation2 + $0x34] sm:$0xf]
    %v67 = vld [vmem:[#allocation2 + $0x38] sm:$0xf]
    %v68 = vld [vmem:[#allocation2 + $0x3c] sm:$0xf]
    %v69 = vld [vmem:[%s3] sm:$0x1]
    %v70 = vperm.slane %v69, 0
    %v87 = vunpack.c.l.b16 %v53
    %v88 = vunpack.c.l.b16 %v54
    %v89 = vunpack.c.l.b16 %v55
    %v90 = vunpack.c.l.b16 %v56
    %v91 = vunpack.c.l.b16 %v57
    %v92 = vunpack.c.l.b16 %v58
    %v93 = vunpack.c.l.b16 %v59
    %v94 = vunpack.c.l.b16 %v60
    %v95 = vunpack.c.l.b16 %v61
    %v96 = vunpack.c.l.b16 %v62
    %v97 = vunpack.c.l.b16 %v63
    %v98 = vunpack.c.l.b16 %v64
    %v99 = vunpack.c.l.b16 %v65
    %v100 = vunpack.c.l.b16 %v66
    %v101 = vunpack.c.l.b16 %v67
    %v102 = vunpack.c.l.b16 %v68
    %v103 = vpack.c.b16 %v88, %v87
    %v104 = vpack.c.b16 %v90, %v89
    %v105 = vpack.c.b16 %v92, %v91
    %v106 = vpack.c.b16 %v94, %v93
    %v107 = vpack.c.b16 %v96, %v95
    %v108 = vpack.c.b16 %v98, %v97
    %v109 = vpack.c.b16 %v100, %v99
    %v110 = vpack.c.b16 %v102, %v101
    %119 = vmatpush.bf16.msra.mxu0 %v110
    %120 = vmatpush.bf16.msra.mxu0 %v109
    %121 = vmatpush.bf16.msra.mxu0 %v108
    %122 = vmatpush.bf16.msra.mxu0 %v107
    %123 = vmatpush.bf16.msra.mxu0 %v106
    %124 = vmatpush.bf16.msra.mxu0 %v105
    %125 = vmatpush.bf16.msra.mxu0 %v104
    %126 = vmatpush.bf16.msra.mxu0 %v103
    %127 = vmatmul.bf16.gmra.mxu0 %v52
    %v128 = vpop.f32.mrf.mxu0
    %v129 = vadd.f32 %v70, %v128
    %v130 = vpop.f32.mrf.mxu0
    %v131 = vadd.f32 %v70, %v130
    %132 = vdwg.mxu0
    %vm133 = vcmp.ge.f32.partialorder %v129, 0.0
    %vm134 = vcmp.ge.f32.partialorder %v131, 0.0
    %v135 = vmul.f32 %v129, 0.01
    %v136 = vmul.f32 %v131, 0.01
    %v137 = vsel %vm133, %v129, %v135
    %v138 = vsel %vm134, %v131, %v136
    %v139 = vpack.c.bf16 %v138, %v137
    %v140 = vld [vmem:[#allocation5] sm:$0xf]
    %v141 = vld [vmem:[#allocation5 + $0x4] sm:$0xf]
    %v142 = vld [vmem:[#allocation5 + $0x8] sm:$0xf]
    %v143 = vld [vmem:[#allocation5 + $0xc] sm:$0xf]
    %v144 = vld [vmem:[#allocation5 + $0x10] sm:$0xf]
    %v145 = vld [vmem:[#allocation5 + $0x14] sm:$0xf]
    %v146 = vld [vmem:[#allocation5 + $0x18] sm:$0xf]
    %v147 = vld [vmem:[#allocation5 + $0x1c] sm:$0xf]
    %v148 = vld [vmem:[#allocation5 + $0x20] sm:$0xf]
    %v149 = vld [vmem:[#allocation5 + $0x24] sm:$0xf]
    %v150 = vld [vmem:[#allocation5 + $0x28] sm:$0xf]
    %v151 = vld [vmem:[#allocation5 + $0x2c] sm:$0xf]
    %v152 = vld [vmem:[#allocation5 + $0x30] sm:$0xf]
    %v153 = vld [vmem:[#allocation5 + $0x34] sm:$0xf]
    %v154 = vld [vmem:[#allocation5 + $0x38] sm:$0xf]
    %v155 = vld [vmem:[#allocation5 + $0x3c] sm:$0xf]
    %v156 = vld [vmem:[%s3 + $0x1] sm:$0x1]
    %v157 = vperm.slane %v156, 0
    %v174 = vunpack.c.l.b16 %v140
    %v175 = vunpack.c.l.b16 %v141
    %v176 = vunpack.c.l.b16 %v142
    %v177 = vunpack.c.l.b16 %v143
    %v178 = vunpack.c.l.b16 %v144
    %v179 = vunpack.c.l.b16 %v145
    %v180 = vunpack.c.l.b16 %v146
    %v181 = vunpack.c.l.b16 %v147
    %v182 = vunpack.c.l.b16 %v148
    %v183 = vunpack.c.l.b16 %v149
    %v184 = vunpack.c.l.b16 %v150
    %v185 = vunpack.c.l.b16 %v151
    %v186 = vunpack.c.l.b16 %v152
    %v187 = vunpack.c.l.b16 %v153
    %v188 = vunpack.c.l.b16 %v154
    %v189 = vunpack.c.l.b16 %v155
    %v190 = vpack.c.b16 %v175, %v174
    %v191 = vpack.c.b16 %v177, %v176
    %v192 = vpack.c.b16 %v179, %v178
    %v193 = vpack.c.b16 %v181, %v180
    %v194 = vpack.c.b16 %v183, %v182
    %v195 = vpack.c.b16 %v185, %v184
    %v196 = vpack.c.b16 %v187, %v186
    %v197 = vpack.c.b16 %v189, %v188
    %206 = vmatpush.bf16.msra.mxu0 %v197
    %207 = vmatpush.bf16.msra.mxu0 %v196
    %208 = vmatpush.bf16.msra.mxu0 %v195
    %209 = vmatpush.bf16.msra.mxu0 %v194
    %210 = vmatpush.bf16.msra.mxu0 %v193
    %211 = vmatpush.bf16.msra.mxu0 %v192
    %212 = vmatpush.bf16.msra.mxu0 %v191
    %213 = vmatpush.bf16.msra.mxu0 %v190
    %214 = vmatmul.bf16.gmra.mxu0 %v139
    %v215 = vpop.f32.mrf.mxu0
    %v216 = vadd.f32 %v157, %v215
    %v217 = vpop.f32.mrf.mxu0
    %v218 = vadd.f32 %v157, %v217
    %219 = vdwg.mxu0
    %220 = vadd.xlane.f32.xlu0 %v216
    %v221 = vpop.xlane.xlu0 %220
    %222 = vadd.xlane.f32.xlu0 %v218
    %v223 = vpop.xlane.xlu0 %222
    %v224 = vmul.f32 %v216, %v216
    %v225 = vmul.f32 %v218, %v218
    %226 = vadd.xlane.f32.xlu0 %v224
    %v227 = vpop.xlane.xlu0 %226
    %228 = vadd.xlane.f32.xlu0 %v225
    %v229 = vpop.xlane.xlu0 %228
    %v230 = vmul.f32 %v221, 0.03125
    %v231 = vmul.f32 %v223, 0.03125
    %v232 = vmul.f32 %v227, 0.03125
    %v233 = vmul.f32 %v229, 0.03125
    %v234 = vmul.f32 %v230, %v230
    %v235 = vmul.f32 %v231, %v231
    %v236 = vsub.f32 %v232, %v234
    %v237 = vsub.f32 %v233, %v235
    %v238 = vmax.f32 %v236, 0.0
    %v239 = vmax.f32 %v237, 0.0
    %v240 = vsub.f32 %v216, %v230
    %v241 = vsub.f32 %v218, %v231
    %v242 = vadd.f32 %v238, 1e-05
    %v243 = vadd.f32 %v239, 1e-05
    %v244 = vrsqrt.pop %v242
    %v245 = vmul.f32 %v244, %v242
    %v246 = vmul.f32 %v245, %v244
    %v247 = vmul.f32 0.5, %v246
    %v248 = vsub.f32 1.5, %v247
    %v249 = vmul.f32 %v244, %v248
    %vm250 = vweird.f32 %v242
    %vm251 = vweird.f32 %v244
    %vm252 = vmor %vm250, %vm251
    %v253 = vsel %vm252, %v244, %v249
    %v254 = vrsqrt.pop %v243
    %v255 = vmul.f32 %v254, %v243
    %v256 = vmul.f32 %v255, %v254
    %v257 = vmul.f32 0.5, %v256
    %v258 = vsub.f32 1.5, %v257
    %v259 = vmul.f32 %v254, %v258
    %vm260 = vweird.f32 %v243
    %vm261 = vweird.f32 %v254
    %vm262 = vmor %vm260, %vm261
    %v263 = vsel %vm262, %v254, %v259
    %v264 = vmul.f32 %v240, %v253
    %v265 = vmul.f32 %v241, %v263
    %v266 = vld [vmem:[%s3 + $0x2] sm:$0x1]
    %v267 = vperm.slane %v266, 0
    %v268 = vmul.f32 %v264, %v267
    %v269 = vmul.f32 %v265, %v267
    %v270 = vld [vmem:[%s3 + $0x3] sm:$0x1]
    %v271 = vperm.slane %v270, 0
    %v272 = vadd.f32 %v268, %v271
    %v273 = vadd.f32 %v269, %v271
    %v274 = vadd.f32 %v272, %v50
    %v275 = vadd.f32 %v273, %v51
    %276 = vst [vmem:[#allocation7] sm:$0xff] %v274
    %277 = vst [vmem:[#allocation7 + $0x8] sm:$0xff] %v275
    // Predicated region
    $region26: #{resnet_block.1} parent=1 // pred_check
      _
    $region27: #{resnet_block.1} parent=1 // pred_check_branch
      %279 = sbr.rel (0) target = $region29
    $region28: #{resnet_block.1} parent=1 // pred_region
      %281 = vsyncadd [#allocation4], 0
      %s282 = sshll.u32 [#allocation7], 4
      %s283 = int_to_ptr.vmem [resolvable:$true] %s282
      %s284 = sshll.u32 %s4, 4
      %s285 = int_to_ptr.hbm [resolvable:$true] %s284
      %290 = dma.vmem_to_hbm [thread:$0]  %s283, 256, %s285, [#allocation4], 128, 128, 8
    $region29: #{resnet_block.1} parent=1 // pred_fallthru
      _
    // Predicated region
    $region30: #{resnet_block.1} parent=1 // pred_check
      _
    $region31: #{resnet_block.1} parent=1 // pred_check_branch
      %292 = sbr.rel (0) target = $region33
    $region32: #{resnet_block.1} parent=1 // pred_region
      %294 = dma.done [#allocation4], 256
    $region33: #{resnet_block.1} parent=1 // pred_fallthru
      _
    %295 = vsyncpa [#allocation3], 1
    %296 = vsyncpa [#allocation6], 1
    %297 = vsyncpa [#allocation4], 1

</llo_original>
